<compile_context>
chip_gen: v7x
topology: tpu7x:2x2x1
jax: 0.10.0
libtpu: 0.0.40
codegen_flags: <defaults>
</compile_context>

<pallas_src>
import jax
import jax.numpy as jnp
from jax.experimental import pallas as pl
from jax.experimental.pallas import tpu as pltpu


def _round_up(x, m):
    return ((x + m - 1) // m) * m


def _vmem_capacity_bytes():
    """Per-TensorCore VMEM capacity; falls back to 128 MiB if unavailable."""
    try:
        return int(pltpu.get_tpu_info().vmem_capacity_bytes)
    except Exception:
        return 128 * 1024 * 1024


# Generation-aware VMEM policy (computed once at import / trace time).
_VMEM_CAP = _vmem_capacity_bytes()
_IS_V7X = _VMEM_CAP < (100 << 20)          # v7x: 64 MiB / TC; v5e/v6e: 128 MiB
if _IS_V7X:
    _VMEM_BUDGET = 24 << 20                 # leave headroom under 64 MiB physical
    _VMEM_LIMIT = 32 << 20
else:
    _VMEM_BUDGET = 48 << 20                 # plenty of room under 128 MiB physical
    _VMEM_LIMIT = 64 << 20


def fused_heads_kernel(x_ref, w_ref, b_ref, o_ref):
    """o = x @ W_fused + b_fused  (single MXU matmul, f32 accumulation/output)."""
    acc = jnp.dot(x_ref[...], w_ref[...], preferred_element_type=jnp.float32)
    o_ref[...] = acc + b_ref[...]           # bias is pre-cast to f32; o is f32


def _choose_batch_tile(B, D, NP, in_itemsize):
    """Largest batch tile whose double-buffered x + out tiles (plus the
    double-buffered resident fused weight/bias) fit the generation-aware
    VMEM budget."""
    sub = 8 if in_itemsize >= 4 else 16      # sublane packing (f32 vs bf16/...)
    out_itemsize = 4                         # f32 output
    # Pallas double-buffers every input by default, including the "resident"
    # weight/bias with a constant index_map -> count them x2.
    resident = 2 * (D * NP * in_itemsize + NP * out_itemsize)
    per_row = 2 * (D * in_itemsize + NP * out_itemsize)   # x tile + out tile, x2 bufs
    tb = max(sub, (_VMEM_BUDGET - resident) // max(per_row, 1))
    tb = min(tb, 2048)                       # per-step overhead already amortized
    align = 128 if B >= 128 else sub         # whole (8,128) vreg tiles when big
    tb = max(align, (tb // align) * align)
    tb = min(tb, _round_up(B, align))        # never (much) larger than the batch
    # Only split the grid for the 2nd TensorCore on v7x, and only when each
    # half still moves a non-trivial (>= ~1 MiB) slab of x.
    if _IS_V7X and (B // 2) * D * in_itemsize >= (1 << 20):
        tb = min(tb, _round_up(pl.cdiv(B, 2), align))
    return int(max(tb, sub))


def fuse_head_params(wa, ba, wc, bc):
    """Fuse actor+critic heads ONCE (not per forward call).

    wa: (D, A), ba: (1, A), wc: (D, 1), bc: (1, 1)
    Returns w_fused (D, A+1) in the weights' dtype and b_fused (1, A+1) in f32.
    """
    w = jnp.concatenate([wa, wc], axis=1)
    b = jnp.concatenate([ba, bc], axis=1).astype(jnp.float32)
    return w, b


@jax.jit
def actor_critic_forward(x, w_fused, b_fused):
    """x: (B, D); w_fused: (D, A+1); b_fused: (1, A+1) f32.
    Returns (actor_logits (B, A) f32, value (B, 1) f32)."""
    B, D = x.shape
    NP = w_fused.shape[1]
    A = NP - 1

    in_itemsize = jnp.dtype(x.dtype).itemsize
    tb = _choose_batch_tile(B, D, NP, in_itemsize)
    grid = (pl.cdiv(B, tb),)                 # partial tail block is clipped by Pallas

    out = pl.pallas_call(
        fused_heads_kernel,
        out_shape=jax.ShapeDtypeStruct((B, NP), jnp.float32),
        grid_spec=pl.GridSpec(
            grid=grid,
            in_specs=[
                pl.BlockSpec((tb, D), lambda i: (i, 0)),    # x tile over batch
                pl.BlockSpec((D, NP), lambda i: (0, 0)),    # fused weight (resident)
                pl.BlockSpec((1, NP), lambda i: (0, 0)),    # fused f32 bias (resident)
            ],
            out_specs=pl.BlockSpec((tb, NP), lambda i: (i, 0)),
        ),
        compiler_params=pltpu.CompilerParams(
            dimension_semantics=("parallel",),
            vmem_limit_bytes=_VMEM_LIMIT,
        ),
    )(x, w_fused, b_fused)

    actor = out[:, :A]
    critic = out[:, A:]
    return actor, critic


def init_params(key, nb_input, nb_action=3, dtype=jnp.float32):
    """Deterministic init mirroring nn.Linear default: U(-1/sqrt(fan_in), 1/sqrt(fan_in))."""
    k1, k2, k3, k4 = jax.random.split(key, 4)
    bound = 1.0 / (nb_input ** 0.5)
    wa = jax.random.uniform(k1, (nb_input, nb_action), dtype, -bound, bound)
    ba = jax.random.uniform(k2, (1, nb_action), dtype, -bound, bound)
    wc = jax.random.uniform(k3, (nb_input, 1), dtype, -bound, bound)
    bc = jax.random.uniform(k4, (1, 1), dtype, -bound, bound)
    return wa, ba, wc, bc


if __name__ == "__main__":
    key = jax.random.PRNGKey(0)
    kx, kp = jax.random.split(key)

    nb_input, nb_action = 32, 3
    wa, ba, wc, bc = init_params(kp, nb_input, nb_action)

    # One-time head fusion (hoisted out of the per-call forward).
    w_fused, b_fused = fuse_head_params(wa, ba, wc, bc)

    for batch in (8, 10):   # batch=10 exercises the clipped partial-tile path
        x = jax.random.normal(jax.random.fold_in(kx, batch),
                              (batch, nb_input), jnp.float32)
        actor, critic = actor_critic_forward(x, w_fused, b_fused)
        jax.block_until_ready((actor, critic))

        # Pure-JAX reference (same math as the PyTorch module).
        actor_ref = x @ wa + ba
        critic_ref = x @ wc + bc
        assert actor.shape == (batch, nb_action)
        assert critic.shape == (batch, 1)
        assert jnp.allclose(actor, actor_ref, atol=1e-5, rtol=1e-5)
        assert jnp.allclose(critic, critic_ref, atol=1e-5, rtol=1e-5)

    print("KERNEL_OK")
</pallas_src>

<mosaic_0001>
module attributes {stable_mosaic.version = 11 : i64} {
  func.func @fused_heads_kernel(%arg0: i32, %arg1: memref<8x32xf32, #tpu.memory_space<vmem>>, %arg2: memref<32x4xf32, #tpu.memory_space<vmem>>, %arg3: memref<1x4xf32, #tpu.memory_space<vmem>>, %arg4: memref<8x4xf32, #tpu.memory_space<vmem>>) attributes {dimension_semantics = [#tpu.dimension_semantics<parallel>], iteration_bounds = array<i64: 1>, scalar_prefetch = 0 : i64, scratch_operands = 0 : i64, tpu.core_type = #tpu.core_type<tc>, window_params = [{transform_indices = @transform_0, window_bounds = array<i64: 8, 32>}, {pipeline_mode = #tpu.pipeline_mode<synchronous>, transform_indices = @transform_1, window_bounds = array<i64: 32, 4>}, {pipeline_mode = #tpu.pipeline_mode<synchronous>, transform_indices = @transform_2, window_bounds = array<i64: 1, 4>}, {transform_indices = @transform_3, window_bounds = array<i64: 8, 4>}]} {
    %c0 = arith.constant 0 : index
    %c0_0 = arith.constant 0 : index
    %0 = vector.load %arg1[%c0, %c0_0] : memref<8x32xf32, #tpu.memory_space<vmem>>, vector<8x32xf32>
    %c0_1 = arith.constant 0 : index
    %c0_2 = arith.constant 0 : index
    %1 = vector.load %arg2[%c0_1, %c0_2] : memref<32x4xf32, #tpu.memory_space<vmem>>, vector<32x4xf32>
    %cst = arith.constant dense<0.000000e+00> : vector<8x4xf32>
    %2 = tpu.matmul %0, %1, %cst {dimension_numbers = #tpu.dot_dimension_numbers<[1], [0], [0], [1], [0, 0, 1, 1], [], []>} : vector<8x32xf32>, vector<32x4xf32>, vector<8x4xf32> -> vector<8x4xf32>
    %c0_3 = arith.constant 0 : index
    %c0_4 = arith.constant 0 : index
    %3 = vector.load %arg3[%c0_3, %c0_4] : memref<1x4xf32, #tpu.memory_space<vmem>>, vector<1x4xf32>
    %4 = vector.broadcast %3 : vector<1x4xf32> to vector<8x4xf32>
    %5 = arith.addf %2, %4 : vector<8x4xf32>
    %c0_5 = arith.constant 0 : index
    %c0_6 = arith.constant 0 : index
    %6 = vector.load %arg4[%c0_5, %c0_6] : memref<8x4xf32, #tpu.memory_space<vmem>>, vector<8x4xf32>
    tpu.vector_store %arg4[%c0_5, %c0_6], %5 {strides = array<i32>} : memref<8x4xf32, #tpu.memory_space<vmem>>, vector<8x4xf32>,
    return
  }
  func.func @transform_0(%arg0: i32) -> (i32, i32) {
    %c0_i32 = arith.constant 0 : i32
    %c0_i32_0 = arith.constant 0 : i32
    return %arg0, %c0_i32 : i32, i32
  }
  func.func @transform_1(%arg0: i32) -> (i32, i32) {
    %c0_i32 = arith.constant 0 : i32
    %c0_i32_0 = arith.constant 0 : i32
    %c0_i32_1 = arith.constant 0 : i32
    return %c0_i32, %c0_i32_0 : i32, i32
  }
  func.func @transform_2(%arg0: i32) -> (i32, i32) {
    %c0_i32 = arith.constant 0 : i32
    %c0_i32_0 = arith.constant 0 : i32
    %c0_i32_1 = arith.constant 0 : i32
    return %c0_i32, %c0_i32_0 : i32, i32
  }
  func.func @transform_3(%arg0: i32) -> (i32, i32) {
    %c0_i32 = arith.constant 0 : i32
    %c0_i32_0 = arith.constant 0 : i32
    return %arg0, %c0_i32 : i32, i32
  }
}

</mosaic_0001>

<llo_original>
// kernel: actor_critic_forward.1
$region0: #{actor_critic_forward.1}
  #allocation0 [shape = 'u32[]', space=smem, size = 0x4, offset = 0x4, fixed_abs, tag = 'smem constant byte address 0x4 - core index']
  #allocation1 [shape = 'u32[144,128]{1,0:T(1,128)}', space=vmem, size = 0x12000, scoped, tag = 'internal scratch']
  %s0 = inlined_call_operand.hbm [shape: f32[8,32], index: 0, kind: input, shape index: {}]
  %s1 = inlined_call_operand.hbm [shape: f32[32,4], index: 1, kind: input, shape index: {}]
  %s2 = inlined_call_operand.hbm [shape: f32[1,4], index: 2, kind: input, shape index: {}]
  %s3 = inlined_call_operand.hbm [shape: f32[8,4], index: 3, kind: output, shape index: {}]
  %s4 = sld [smem:[#allocation0]]
  $region34: #{actor_critic_forward.1} parent=0
    _
  %s6 = ssub.s32 1, %s4
  %s7 = scalar_select 0, %s6, %s4
  $region1: #{actor_critic_forward.1} parent=0
    #allocation2 [shape = 'u8[4096]{0}', space=vmem, size = 0x1000, scoped, tag = 'input window, operand 0, single buffered']
    #allocation3 [shape = 's32[1]{0}', space=sflag, size = 0x4, scoped, tag = 'scoped memory for actor_critic_forward.1']
    #allocation4 [shape = 's32[1]{0}', space=sflag, size = 0x4, scoped, tag = 'scoped memory for actor_critic_forward.1']
    #allocation5 [shape = 'u8[16384]{0}', space=vmem, size = 0x4000, scoped, tag = 'input window, operand 1, single buffered']
    #allocation6 [shape = 's32[1]{0}', space=sflag, size = 0x4, scoped, tag = 'scoped memory for actor_critic_forward.1']
    #allocation7 [shape = 'u8[512]{0}', space=vmem, size = 0x400, scoped, tag = 'input window, operand 2, single buffered']
    #allocation8 [shape = 'u8[4096]{0}', space=vmem, size = 0x1000, scoped, tag = 'output window, operand 0, single buffered']
    %8 = vsyncpa [#allocation3], 0
    %9 = vsyncpa [#allocation6], 0
    %10 = vsyncpa [#allocation4], 0
    // Predicated region
    $region2: #{actor_critic_forward.1} parent=1 // pred_check
      _
    $region3: #{actor_critic_forward.1} parent=1 // pred_check_branch
      %12 = sbr.rel (0) target = $region5
    $region4: #{actor_critic_forward.1} parent=1 // pred_region
      %s14 = ssub.s32 128, 128
      %15 = vsyncadd [#allocation3], %s14
      %s17 = sshll.u32 [#allocation2], 4
      %s18 = int_to_ptr.vmem [resolvable:$true] %s17
      %20 = dma.hbm_to_vmem [thread:$0]  %s0, 128, %s18, [#allocation3]
    $region5: #{actor_critic_forward.1} parent=1 // pred_fallthru
      _
    // Predicated region
    $region6: #{actor_critic_forward.1} parent=1 // pred_check
      _
    $region7: #{actor_critic_forward.1} parent=1 // pred_check_branch
      %22 = sbr.rel (0) target = $region9
    $region8: #{actor_critic_forward.1} parent=1 // pred_region
      %s24 = ssub.s32 512, 512
      %25 = vsyncadd [#allocation6], %s24
      %s26 = sshll.u32 [#allocation5], 4
      %s27 = int_to_ptr.vmem [resolvable:$true] %s26
      %32 = dma.hbm_to_vmem [thread:$0]  %s1, 512, %s27, [#allocation6], 128, 128, 8
    $region9: #{actor_critic_forward.1} parent=1 // pred_fallthru
      _
    // Predicated region
    $region10: #{actor_critic_forward.1} parent=1 // pred_check
      _
    $region11: #{actor_critic_forward.1} parent=1 // pred_check_branch
      %34 = sbr.rel (0) target = $region13
    $region12: #{actor_critic_forward.1} parent=1 // pred_region
      %s36 = ssub.s32 16, 16
      %37 = vsyncadd [#allocation6], %s36
      %s39 = sshll.u32 [#allocation7], 4
      %s40 = int_to_ptr.vmem [resolvable:$true] %s39
      %42 = dma.hbm_to_vmem [thread:$0]  %s2, 16, %s40, [#allocation6]
    $region13: #{actor_critic_forward.1} parent=1 // pred_fallthru
      _
    // Predicated region
    $region14: #{actor_critic_forward.1} parent=1 // pred_check
      _
    $region15: #{actor_critic_forward.1} parent=1 // pred_check_branch
      %44 = sbr.rel (0) target = $region17
    $region16: #{actor_critic_forward.1} parent=1 // pred_region
      %45 = dma.done [#allocation3], 128
    $region17: #{actor_critic_forward.1} parent=1 // pred_fallthru
      _
    // Predicated region
    $region18: #{actor_critic_forward.1} parent=1 // pred_check
      _
    $region19: #{actor_critic_forward.1} parent=1 // pred_check_branch
      %47 = sbr.rel (0) target = $region21
    $region20: #{actor_critic_forward.1} parent=1 // pred_region
      %48 = dma.done [#allocation6], 512
    $region21: #{actor_critic_forward.1} parent=1 // pred_fallthru
      _
    // Predicated region
    $region22: #{actor_critic_forward.1} parent=1 // pred_check
      _
    $region23: #{actor_critic_forward.1} parent=1 // pred_check_branch
      %50 = sbr.rel (0) target = $region25
    $region24: #{actor_critic_forward.1} parent=1 // pred_region
      %51 = dma.done [#allocation6], 16
    $region25: #{actor_critic_forward.1} parent=1 // pred_fallthru
      _
    %v52 = vld [vmem:[#allocation2] sm:$0xff]
    %v53 = vld [vmem:[#allocation5] sm:$0xff]
    %v54 = vld [vmem:[#allocation5 + $0x8] sm:$0xff]
    %v55 = vld [vmem:[#allocation5 + $0x10] sm:$0xff]
    %v56 = vld [vmem:[#allocation5 + $0x18] sm:$0xff]
    %v57 = vld [vmem:[#allocation7] sm:$0x1]
    %v59 = vlaneseq
    %v60 = vshrl.u32 %v59, 7
    %v61 = vsub.s32 0, %v60
    %v62 = vrot.slane %v57, %v61
    %vm64 = vcmask 261120
    %v66 = vsel %vm64, %v52, 0
    %68 = vmatprep.subr.mxu0 0.0
    %69 = vmatpush1.msra.mxu0 %v53
    %70 = vmatprep.subr.mxu0 0.0
    %71 = vmatpush1.msra.mxu0 %v54
    %72 = vmatprep.subr.mxu0 0.0
    %73 = vmatpush1.msra.mxu0 %v55
    %74 = vmatprep.subr.mxu0 0.0
    %75 = vmatpush1.msra.mxu0 %v56
    %76 = vmatprep.subr.mxu0 0.0
    %77 = vmatpush1.msra.mxu0 0.0
    %78 = vmatprep.subr.mxu0 0.0
    %79 = vmatpush1.msra.mxu0 0.0
    %80 = vmatprep.subr.mxu0 0.0
    %81 = vmatpush1.msra.mxu0 0.0
    %82 = vmatprep.subr.mxu0 0.0
    %83 = vmatpush1.msra.mxu0 0.0
    %84 = vmatprep.subr.mxu0 0.0
    %85 = vmatpush1.msra.mxu0 0.0
    %86 = vmatprep.subr.mxu0 0.0
    %87 = vmatpush1.msra.mxu0 0.0
    %88 = vmatprep.subr.mxu0 0.0
    %89 = vmatpush1.msra.mxu0 0.0
    %90 = vmatprep.subr.mxu0 0.0
    %91 = vmatpush1.msra.mxu0 0.0
    %92 = vmatprep.subr.mxu0 0.0
    %93 = vmatpush1.msra.mxu0 0.0
    %94 = vmatprep.subr.mxu0 0.0
    %95 = vmatpush1.msra.mxu0 0.0
    %96 = vmatprep.subr.mxu0 0.0
    %97 = vmatpush1.msra.mxu0 0.0
    %98 = vmatprep.subr.mxu0 0.0
    %99 = vmatpush1.msra.mxu0 0.0
    %100 = vmatprep.subr.mxu0 0.0
    %101 = vmatpush1.msra.mxu0 0.0
    %102 = vmatprep.subr.mxu0 0.0
    %103 = vmatpush1.msra.mxu0 0.0
    %104 = vmatprep.subr.mxu0 0.0
    %105 = vmatpush1.msra.mxu0 0.0
    %106 = vmatprep.subr.mxu0 0.0
    %107 = vmatpush1.msra.mxu0 0.0
    %108 = vmatprep.subr.mxu0 0.0
    %109 = vmatpush1.msra.mxu0 0.0
    %110 = vmatprep.subr.mxu0 0.0
    %111 = vmatpush1.msra.mxu0 0.0
    %112 = vmatprep.subr.mxu0 0.0
    %113 = vmatpush1.msra.mxu0 0.0
    %114 = vmatprep.subr.mxu0 0.0
    %115 = vmatpush1.msra.mxu0 0.0
    %116 = vmatprep.subr.mxu0 0.0
    %117 = vmatpush1.msra.mxu0 0.0
    %118 = vmatprep.subr.mxu0 0.0
    %119 = vmatpush1.msra.mxu0 0.0
    %120 = vmatprep.subr.mxu0 0.0
    %121 = vmatpush1.msra.mxu0 0.0
    %122 = vmatprep.subr.mxu0 0.0
    %123 = vmatpush1.msra.mxu0 0.0
    %124 = vmatprep.subr.mxu0 0.0
    %125 = vmatpush1.msra.mxu0 0.0
    %126 = vmatprep.subr.mxu0 0.0
    %127 = vmatpush1.msra.mxu0 0.0
    %128 = vmatprep.subr.mxu0 0.0
    %129 = vmatpush1.msra.mxu0 0.0
    %130 = vmatprep.subr.mxu0 0.0
    %131 = vmatpush1.msra.mxu0 0.0
    %132 = vmatprep.mubr.f32.mxu0 0.0
    %133 = vmatmul.mubr.f32.gmra.mrb[0].mxu0 %v66
    %v134 = vpop.f32.mrb[0].mxu0
    %v135 = vadd.f32 %v62, %v134
    %v136 = vpop.f32.mrb[0].mxu0
    %137 = vdwg.mxu0
    %vm138 = vcmask 31744
    %139 = vst.msk [vmem:[#allocation8] sm:$0xff] %vm138, %v135
    // Predicated region
    $region26: #{actor_critic_forward.1} parent=1 // pred_check
      _
    $region27: #{actor_critic_forward.1} parent=1 // pred_check_branch
      %141 = sbr.rel (0) target = $region29
    $region28: #{actor_critic_forward.1} parent=1 // pred_region
      %s143 = ssub.s32 128, 128
      %144 = vsyncadd [#allocation4], %s143
      %s146 = sshll.u32 [#allocation8], 4
      %s147 = int_to_ptr.vmem [resolvable:$true] %s146
      %149 = dma.vmem_to_hbm [thread:$0]  %s147, 128, %s3, [#allocation4]
    $region29: #{actor_critic_forward.1} parent=1 // pred_fallthru
      _
    // Predicated region
    $region30: #{actor_critic_forward.1} parent=1 // pred_check
      _
    $region31: #{actor_critic_forward.1} parent=1 // pred_check_branch
      %151 = sbr.rel (0) target = $region33
    $region32: #{actor_critic_forward.1} parent=1 // pred_region
      %152 = dma.done [#allocation4], 128
    $region33: #{actor_critic_forward.1} parent=1 // pred_fallthru
      _
    %153 = vsyncpa [#allocation3], 1
    %154 = vsyncpa [#allocation6], 1
    %155 = vsyncpa [#allocation4], 1

</llo_original>
